<compile_context>
chip_gen: v7x
topology: tpu7x:2x2x1
jax: 0.10.0
libtpu: 0.0.40
codegen_flags: <defaults>
</compile_context>

<pallas_src>
import jax
import jax.numpy as jnp
from jax.experimental import pallas as pl
from jax.experimental.pallas import tpu as pltpu


# ----------------------------------------------------------------------------
# Kernels
# ----------------------------------------------------------------------------
def _copy_kernel(x_ref, o_ref):
    # Pure data movement: identity copy of the current VMEM tile.
    o_ref[...] = x_ref[...]


def _dma_copy_kernel(x_hbm_ref, o_hbm_ref, sem):
    # Whole-array HBM -> HBM DMA: no VMEM staging, no vld/vst loop.
    cp = pltpu.make_async_copy(x_hbm_ref, o_hbm_ref, sem)
    cp.start()
    cp.wait()


# ----------------------------------------------------------------------------
# Generation-aware tiling
# ----------------------------------------------------------------------------
def _tpu_generation_budget():
    """Return (vmem_limit_bytes, per-buffer tile budget in bytes).

    The BlockSpec pipeline keeps ~4 tile-sized buffers resident (input +
    output, each double-buffered), so the per-buffer tile budget is roughly
    (scoped_vmem * 0.7) / 4:
      v7x : 64 MiB physical VMEM, 3.2 TB/s HBM -> 44 MiB scoped, ~7 MiB tiles
      v6e : 128 MiB physical,     1.4 TB/s HBM -> 32 MiB scoped, ~5 MiB tiles
      v5e : 128 MiB physical,     0.8 TB/s HBM -> 24 MiB scoped, ~4 MiB tiles
    Small tiles hurt the faster chips most (fixed ~0.35 us per grid step).
    """
    kind = ""
    try:
        kind = jax.devices()[0].device_kind.lower()
    except Exception:
        pass
    phys_vmem = None
    try:
        phys_vmem = int(pltpu.get_tpu_info().vmem_capacity_bytes)
    except Exception:
        pass
    if "v7" in kind or (phys_vmem is not None and phys_vmem <= (64 << 20)):
        return 44 << 20, 7 << 20
    if "v5" in kind:
        return 24 << 20, 4 << 20
    # v6e (or any other 128 MiB-VMEM chip): default scoped 32 MiB already
    # fits ~5 MiB tiles; set it explicitly anyway.
    return 32 << 20, 5 << 20


def _choose_lane_width(total):
    """Widest lane-dense last dim (multiple of 128) dividing `total`."""
    for lanes in (4096, 2048, 1024, 512, 256, 128):
        if total % lanes == 0:
            return lanes
    return None


def _choose_tile_rows(num_rows, lanes, itemsize, tile_budget_bytes):
    """Row tile sized to the generation-aware per-buffer budget."""
    rows = max(1, tile_budget_bytes // (lanes * itemsize))
    if rows >= num_rows:
        return num_rows  # single / full-extent block: always legal
    # Align to 32 sublanes: native packing for f32 (8), bf16 (16), int8 (32).
    rows = max(32, (rows // 32) * 32)
    return min(rows, num_rows)


# ----------------------------------------------------------------------------
# pallas_call wrappers
# ----------------------------------------------------------------------------
def _pallas_contiguous_copy(flat_2d):
    """Identity copy of a lane-dense (R, L) slab via the BlockSpec pipeline."""
    num_rows, lanes = flat_2d.shape
    itemsize = jnp.dtype(flat_2d.dtype).itemsize
    vmem_limit_bytes, tile_budget = _tpu_generation_budget()
    tile_r = _choose_tile_rows(num_rows, lanes, itemsize, tile_budget)
    grid = (pl.cdiv(num_rows, tile_r),)
    total_bytes = num_rows * lanes * itemsize
    return pl.pallas_call(
        _copy_kernel,
        out_shape=jax.ShapeDtypeStruct((num_rows, lanes), flat_2d.dtype),
        grid_spec=pltpu.PrefetchScalarGridSpec(
            num_scalar_prefetch=0,
            grid=grid,
            in_specs=[pl.BlockSpec((tile_r, lanes), lambda i: (i, 0))],
            out_specs=pl.BlockSpec((tile_r, lanes), lambda i: (i, 0)),
        ),
        compiler_params=pltpu.CompilerParams(
            # "parallel" lets v7x shard the row grid across its 2 TensorCores;
            # a no-op on single-TC v5e/v6e.
            dimension_semantics=("parallel",),
            vmem_limit_bytes=vmem_limit_bytes,
        ),
        # Memory-bound copy: tell XLA's scheduler the exact byte traffic.
        cost_estimate=pl.CostEstimate(
            flops=0, transcendentals=0, bytes_accessed=2 * total_bytes),
    )(flat_2d)


def _pallas_hbm_dma_copy(flat_2d):
    """Identity copy as a single HBM->HBM DMA (no VMEM staging)."""
    num_rows, lanes = flat_2d.shape
    itemsize = jnp.dtype(flat_2d.dtype).itemsize
    total_bytes = num_rows * lanes * itemsize
    return pl.pallas_call(
        _dma_copy_kernel,
        out_shape=jax.ShapeDtypeStruct((num_rows, lanes), flat_2d.dtype),
        in_specs=[pl.BlockSpec(memory_space=pl.ANY)],
        out_specs=pl.BlockSpec(memory_space=pl.ANY),
        scratch_shapes=[pltpu.SemaphoreType.DMA],
        cost_estimate=pl.CostEstimate(
            flops=0, transcendentals=0, bytes_accessed=2 * total_bytes),
    )(flat_2d)


# ----------------------------------------------------------------------------
# Module
# ----------------------------------------------------------------------------
class View:
    """Pallas/JAX equivalent of the PyTorch `View` module (x.view(*dim))."""

    def __init__(self, dim, use_pallas_copy=False, use_hbm_dma=False):
        self.dim = tuple(dim)
        self.use_pallas_copy = use_pallas_copy
        self.use_hbm_dma = use_hbm_dma

    def __call__(self, x, *args):
        if not (self.use_pallas_copy or self.use_hbm_dma):
            # view is metadata-only: a contiguous reshape is exact and free.
            return x.reshape(self.dim)

        total = x.size
        lanes = _choose_lane_width(total)
        if lanes is None:
            # TODO(synk): element counts not divisible by 128 skip the kernel
            # copy (pure metadata reshape, numerically identical to torch.view).
            return x.reshape(self.dim)
        flat = x.reshape(total // lanes, lanes)
        if self.use_hbm_dma:
            flat = _pallas_hbm_dma_copy(flat)
        else:
            flat = _pallas_contiguous_copy(flat)
        return flat.reshape(self.dim)


if __name__ == "__main__":
    key = jax.random.PRNGKey(0)
    # Small NCHW input consistent with a conv-style pipeline.
    x = jax.random.normal(key, (2, 4, 16, 16), dtype=jnp.float32)
    ref = x.reshape(2, 4, 256)

    # Default (recommended) path: metadata-only reshape, no kernel.
    view_free = View((2, 4, 256))
    y_free = jax.block_until_ready(view_free(x))
    assert y_free.shape == ref.shape and y_free.dtype == ref.dtype
    assert bool(jnp.array_equal(y_free, ref))

    # BlockSpec-pipelined VMEM-staged copy (benchmark/demo path).
    view_copy = View((2, 4, 256), use_pallas_copy=True)
    y_copy = jax.block_until_ready(view_copy(x))
    assert y_copy.shape == ref.shape and y_copy.dtype == ref.dtype
    assert bool(jnp.array_equal(y_copy, ref))

    # HBM->HBM DMA copy (max-bandwidth benchmark path).
    view_dma = View((2, 4, 256), use_hbm_dma=True)
    y_dma = jax.block_until_ready(view_dma(x))
    assert y_dma.shape == ref.shape and y_dma.dtype == ref.dtype
    assert bool(jnp.array_equal(y_dma, ref))

    print("KERNEL_OK")
</pallas_src>

<mosaic_0001>
module attributes {stable_mosaic.version = 11 : i64} {
  func.func @_copy_kernel(%arg0: i32, %arg1: memref<1x2048xf32, #tpu.memory_space<vmem>>, %arg2: memref<1x2048xf32, #tpu.memory_space<vmem>>) attributes {dimension_semantics = [#tpu.dimension_semantics<parallel>], iteration_bounds = array<i64: 1>, scalar_prefetch = 0 : i64, scratch_operands = 0 : i64, tpu.core_type = #tpu.core_type<tc>, window_params = [{transform_indices = @transform_0, window_bounds = array<i64: 1, 2048>}, {transform_indices = @transform_1, window_bounds = array<i64: 1, 2048>}]} {
    %c0 = arith.constant 0 : index
    %c0_0 = arith.constant 0 : index
    %0 = vector.load %arg1[%c0, %c0_0] : memref<1x2048xf32, #tpu.memory_space<vmem>>, vector<1x2048xf32>
    %c0_1 = arith.constant 0 : index
    %c0_2 = arith.constant 0 : index
    %1 = vector.load %arg2[%c0_1, %c0_2] : memref<1x2048xf32, #tpu.memory_space<vmem>>, vector<1x2048xf32>
    tpu.vector_store %arg2[%c0_1, %c0_2], %0 {strides = array<i32>} : memref<1x2048xf32, #tpu.memory_space<vmem>>, vector<1x2048xf32>,
    return
  }
  func.func @transform_0(%arg0: i32) -> (i32, i32) {
    %c0_i32 = arith.constant 0 : i32
    %c0_i32_0 = arith.constant 0 : i32
    return %arg0, %c0_i32 : i32, i32
  }
  func.func @transform_1(%arg0: i32) -> (i32, i32) {
    %c0_i32 = arith.constant 0 : i32
    %c0_i32_0 = arith.constant 0 : i32
    return %arg0, %c0_i32 : i32, i32
  }
}

</mosaic_0001>

<llo_original>
// kernel: tpu_custom_call.1
$region0: #{tpu_custom_call.1}
  #allocation0 [shape = 'u32[]', space=smem, size = 0x4, offset = 0x4, fixed_abs, tag = 'smem constant byte address 0x4 - core index']
  #allocation1 [shape = 'u32[144,128]{1,0:T(1,128)}', space=vmem, size = 0x12000, scoped, tag = 'internal scratch']
  %s0 = inlined_call_operand.hbm [shape: f32[1,2048], index: 0, kind: input, shape index: {}]
  %s1 = inlined_call_operand.hbm [shape: f32[1,2048], index: 1, kind: output, shape index: {}]
  %s2 = sld [smem:[#allocation0]]
  $region18: #{tpu_custom_call.1} parent=0
    _
  %s4 = ssub.s32 1, %s2
  %s5 = scalar_select 0, %s4, %s2
  $region1: #{tpu_custom_call.1} parent=0
    #allocation2 [shape = 'u8[8192]{0}', space=vmem, size = 0x2000, scoped, tag = 'input window, operand 0, single buffered']
    #allocation3 [shape = 's32[1]{0}', space=sflag, size = 0x4, scoped, tag = 'scoped memory for tpu_custom_call.1']
    #allocation4 [shape = 's32[1]{0}', space=sflag, size = 0x4, scoped, tag = 'scoped memory for tpu_custom_call.1']
    #allocation5 [shape = 'u8[8192]{0}', space=vmem, size = 0x2000, scoped, tag = 'output window, operand 0, single buffered']
    %6 = vsyncpa [#allocation3], 0
    %7 = vsyncpa [#allocation4], 0
    // Predicated region
    $region2: #{tpu_custom_call.1} parent=1 // pred_check
      _
    $region3: #{tpu_custom_call.1} parent=1 // pred_check_branch
      %9 = sbr.rel (0) target = $region5
    $region4: #{tpu_custom_call.1} parent=1 // pred_region
      %s11 = ssub.s32 256, 256
      %12 = vsyncadd [#allocation3], %s11
      %s14 = sshll.u32 [#allocation2], 4
      %s15 = int_to_ptr.vmem [resolvable:$true] %s14
      %17 = dma.hbm_to_vmem [thread:$0]  %s0, 256, %s15, [#allocation3]
    $region5: #{tpu_custom_call.1} parent=1 // pred_fallthru
      _
    // Predicated region
    $region6: #{tpu_custom_call.1} parent=1 // pred_check
      _
    $region7: #{tpu_custom_call.1} parent=1 // pred_check_branch
      %19 = sbr.rel (0) target = $region9
    $region8: #{tpu_custom_call.1} parent=1 // pred_region
      %20 = dma.done [#allocation3], 256
    $region9: #{tpu_custom_call.1} parent=1 // pred_fallthru
      _
    %v21 = vld [vmem:[#allocation2] sm:$0xff]
    %v22 = vld [vmem:[#allocation2 + $0x8] sm:$0xff]
    %23 = vst [vmem:[#allocation5] sm:$0xff] %v21
    %24 = vst [vmem:[#allocation5 + $0x8] sm:$0xff] %v22
    // Predicated region
    $region10: #{tpu_custom_call.1} parent=1 // pred_check
      _
    $region11: #{tpu_custom_call.1} parent=1 // pred_check_branch
      %26 = sbr.rel (0) target = $region13
    $region12: #{tpu_custom_call.1} parent=1 // pred_region
      %s28 = ssub.s32 256, 256
      %29 = vsyncadd [#allocation4], %s28
      %s31 = sshll.u32 [#allocation5], 4
      %s32 = int_to_ptr.vmem [resolvable:$true] %s31
      %34 = dma.vmem_to_hbm [thread:$0]  %s32, 256, %s1, [#allocation4]
    $region13: #{tpu_custom_call.1} parent=1 // pred_fallthru
      _
    // Predicated region
    $region14: #{tpu_custom_call.1} parent=1 // pred_check
      _
    $region15: #{tpu_custom_call.1} parent=1 // pred_check_branch
      %36 = sbr.rel (0) target = $region17
    $region16: #{tpu_custom_call.1} parent=1 // pred_region
      %37 = dma.done [#allocation4], 256
    $region17: #{tpu_custom_call.1} parent=1 // pred_fallthru
      _
    %38 = vsyncpa [#allocation3], 1
    %39 = vsyncpa [#allocation4], 1

</llo_original>
